<compile_context>
chip_gen: v5e
topology: v5e:2x2
jax: 0.10.0
libtpu: 0.0.40
codegen_flags: <defaults>
</compile_context>

<pallas_src>
import jax
import jax.numpy as jnp
from jax.experimental import pallas as pl
from jax.experimental.pallas import tpu as pltpu


def _round_up(x, m):
    return ((x + m - 1) // m) * m


def _cdiv(a, b):
    return (a + b - 1) // b


# ----------------------------------------------------------------------------- kernels
def _partial_down_proj(x_ref, w13_ref, b13_ref, w2_ref):
    """(TM, dim) f32 partial of  silu(x@W1_k + b1_k) * (x@W3_k + b3_k) @ W2_k.

    w13_ref holds the k-th [dim, 2*TK] slab with W1_k in the first TK columns and
    W3_k in the last TK (interleaved layout built once in the wrapper), so a single
    wide MXU matmul produces both branches; SiLU stays in f32 (EUP sigmoid)."""
    tk = w2_ref.shape[0]
    h = jnp.dot(x_ref[...], w13_ref[...], preferred_element_type=jnp.float32)
    h = h + b13_ref[...]
    g = h[:, :tk]                       # gate branch   (lane-aligned static slice)
    v = h[:, tk:]                       # value branch
    act = (g * jax.nn.sigmoid(g) * v).astype(w2_ref.dtype)
    return jnp.dot(act, w2_ref[...], preferred_element_type=jnp.float32)


def mlp_kernel_multi(x_ref, w13_ref, b13_ref, w2_ref, b2_ref, o_ref, acc_ref):
    k = pl.program_id(1)

    @pl.when(k == 0)
    def _init():
        acc_ref[...] = jnp.zeros_like(acc_ref)

    acc_ref[...] += _partial_down_proj(x_ref, w13_ref, b13_ref, w2_ref)

    # Add b2 exactly once and store on the final reduction step.
    @pl.when(k == pl.num_programs(1) - 1)
    def _store():
        o_ref[...] = (acc_ref[...] + b2_ref[...]).astype(o_ref.dtype)


def mlp_kernel_single(x_ref, w13_ref, b13_ref, w2_ref, b2_ref, o_ref):
    # Single reduction step: no accumulator round-trip, write the result directly.
    o_ref[...] = (_partial_down_proj(x_ref, w13_ref, b13_ref, w2_ref)
                  + b2_ref[...]).astype(o_ref.dtype)


# ----------------------------------------------------------------------------- tiling
def _tpu_vmem_and_cores():
    """(VMEM capacity per TensorCore, TensorCores per chip), conservative fallback."""
    try:
        info = pltpu.get_tpu_info()
        cap = int(getattr(info, "vmem_capacity_bytes", 0)) or (64 << 20)
    except Exception:
        cap = 64 << 20          # unknown chip: assume v7x-sized VMEM (safe everywhere)
    # v7x is the only generation with ~64 MiB VMEM/core, and it has 2 TCs per chip.
    ncores = 2 if cap < (96 << 20) else 1
    return cap, ncores


def _footprint(tm, tk, dim, w_isz, out_isz):
    """Conservative VMEM bytes for one grid step: BlockSpec double-buffers every
    operand, output counted in its real dtype, plus the f32 accumulator scratch."""
    return (2 * tm * dim * w_isz              # x tile (double-buffered, bf16)
            + 2 * dim * (2 * tk) * w_isz      # fused w1/w3 slab
            + 2 * tk * dim * w_isz            # w2 slab
            + 2 * (2 * tk) * 4                # fused b1/b3 (f32)
            + 2 * dim * 4                     # b2 (f32)
            + 2 * tm * dim * out_isz          # output tile (real out dtype)
            + tm * dim * 4)                   # f32 accumulator scratch


def _pick_tiles(batch, dim, inter, w_isz, out_isz, cap, ncores):
    """Generation-aware tile selection.

    TM: up to 512 (multiple of 16, preferring 256/512).  Arithmetic intensity over
        the streamed weights is ~TM flop/byte and the MXU/HBM crossover is ~TM>=350
        on v6e (~320-380/TC on v7x), so large batches get TM=512; on 2-TC chips we
        guarantee >= 2 batch tiles so both TensorCores get work.
    TK: largest 128-multiple divisor of inter whose working set fits ~78% of this
        generation's VMEM (~100 MiB on v5e/v6e, ~50 MiB on v7x); candidates extend
        to 4096 for the weight-streaming-bound small-TM (decode) regime.
    """
    budget = int(cap * 0.78)

    b16 = _round_up(max(batch, 1), 16)
    if b16 >= 512:
        tm = 512
    elif b16 >= 256:
        tm = 256
    else:
        tm = b16
    if ncores >= 2 and batch >= 32 and _cdiv(batch, tm) < 2:
        tm = _round_up(_cdiv(batch, 2), 16)   # make both v7x TensorCores useful

    tk_cands = [c for c in (4096, 2048, 1024, 512, 256, 128) if inter % c == 0]
    if not tk_cands:
        tk_cands = [inter]                    # irregular inter: single reduction step

    tm_cands = sorted({t for t in (tm, 256, 128, 64, 32, 16) if t <= tm}, reverse=True)
    for t in tm_cands:                        # prefer large TM, then the largest TK
        for c in tk_cands:
            if _footprint(t, c, dim, w_isz, out_isz) <= budget:
                return t, c
    # Nothing fits the budget (enormous dim): best-effort smallest tiles.
    return tm_cands[-1], tk_cands[-1]


# ----------------------------------------------------------------------------- wrapper
def mlp_pallas(x, w1, b1, w2, b2, w3, b3, *, tm=None, tk=None, use_bf16=True):
    """x: [B, dim]; w1/w3: [dim, inter]; w2: [inter, dim]; b1/b3: [1, inter];
    b2: [1, dim].  Weights are stored transposed vs. torch.nn.Linear
    ([in_features, out_features])."""
    out_dtype = x.dtype
    B, dim = x.shape
    inter = w1.shape[1]

    cdt = jnp.bfloat16 if use_bf16 else x.dtype
    w_isz = jnp.dtype(cdt).itemsize
    out_isz = jnp.dtype(out_dtype).itemsize

    cap, ncores = _tpu_vmem_and_cores()
    auto_tm, auto_tk = _pick_tiles(B, dim, inter, w_isz, out_isz, cap, ncores)
    tm = auto_tm if tm is None else tm
    tk = auto_tk if tk is None else tk
    assert inter % tk == 0, (inter, tk)
    nk = inter // tk

    # Pad the batch up to a multiple of the batch tile (kernel sees full tiles).
    B_pad = _round_up(B, tm)
    if B_pad != B:
        x = jnp.pad(x, ((0, B_pad - B), (0, 0)))

    # Interleave W1/W3 (and b1/b3) per reduction tile: slab k holds W1_k followed by
    # W3_k, so each grid step reads one contiguous [dim, 2*TK] slab (half the DMA
    # descriptors) and issues one wide MXU matmul for both branches.
    w13 = jnp.concatenate(
        [w1.reshape(dim, nk, tk), w3.reshape(dim, nk, tk)], axis=2
    ).reshape(dim, 2 * inter).astype(cdt)
    b13 = jnp.concatenate(
        [b1.reshape(1, nk, tk), b3.reshape(1, nk, tk)], axis=2
    ).reshape(1, 2 * inter).astype(jnp.float32)
    xc = x.astype(cdt)
    w2c = w2.astype(cdt)
    b2f = b2.astype(jnp.float32)

    vmem_need = _footprint(tm, tk, dim, w_isz, out_isz)
    vmem_limit = int(min(max(int(vmem_need * 1.2) + (4 << 20), 16 << 20),
                         int(cap * 0.92)))

    if nk == 1:
        grid = (B_pad // tm,)
        in_specs = [
            pl.BlockSpec((tm, dim), lambda i: (i, 0)),         # x
            pl.BlockSpec((dim, 2 * tk), lambda i: (0, 0)),     # fused w1/w3 (resident)
            pl.BlockSpec((1, 2 * tk), lambda i: (0, 0)),       # fused b1/b3
            pl.BlockSpec((tk, dim), lambda i: (0, 0)),         # w2 (resident)
            pl.BlockSpec((1, dim), lambda i: (0, 0)),          # b2
        ]
        out_specs = pl.BlockSpec((tm, dim), lambda i: (i, 0))
        scratch = []
        kernel = mlp_kernel_single
        dims = ("parallel",)
    else:
        grid = (B_pad // tm, nk)
        in_specs = [
            pl.BlockSpec((tm, dim), lambda i, k: (i, 0)),      # x (resident over k)
            pl.BlockSpec((dim, 2 * tk), lambda i, k: (0, k)),  # fused w1/w3 slab k
            pl.BlockSpec((1, 2 * tk), lambda i, k: (0, k)),    # fused b1/b3 slab k
            pl.BlockSpec((tk, dim), lambda i, k: (k, 0)),      # w2 slab k
            pl.BlockSpec((1, dim), lambda i, k: (0, 0)),       # b2 (resident)
        ]
        out_specs = pl.BlockSpec((tm, dim), lambda i, k: (i, 0))
        scratch = [pltpu.VMEM((tm, dim), jnp.float32)]
        kernel = mlp_kernel_multi
        dims = ("parallel", "arbitrary")

    out = pl.pallas_call(
        kernel,
        out_shape=jax.ShapeDtypeStruct((B_pad, dim), out_dtype),
        grid_spec=pltpu.PrefetchScalarGridSpec(
            num_scalar_prefetch=0,
            grid=grid,
            in_specs=in_specs,
            out_specs=out_specs,
            scratch_shapes=scratch,
        ),
        compiler_params=pltpu.CompilerParams(
            dimension_semantics=dims,
            vmem_limit_bytes=vmem_limit,
        ),
    )(xc, w13, b13, w2c, b2f)

    return out[:B] if B_pad != B else out


# ----------------------------------------------------------------------------- reference
def init_linear(key, in_features, out_features, dtype=jnp.float32):
    # Matches torch.nn.Linear default init: U(-1/sqrt(in), 1/sqrt(in)).
    kw, kb = jax.random.split(key)
    bound = 1.0 / (in_features ** 0.5)
    w = jax.random.uniform(kw, (in_features, out_features), dtype, -bound, bound)
    b = jax.random.uniform(kb, (1, out_features), dtype, -bound, bound)
    return w, b


def mlp_reference(x, w1, b1, w2, b2, w3, b3):
    h1 = x @ w1 + b1
    gate = h1 * jax.nn.sigmoid(h1)
    h3 = x @ w3 + b3
    return (gate * h3) @ w2 + b2


def mlp_reference_quant(x, w1, b1, w2, b2, w3, b3):
    """Reference with the same bf16 quantization points as the kernel."""
    bf = lambda a: a.astype(jnp.bfloat16).astype(jnp.float32)
    h1 = bf(x) @ bf(w1) + b1
    gate = h1 * jax.nn.sigmoid(h1)
    h3 = bf(x) @ bf(w3) + b3
    act = bf(gate * h3)
    return act @ bf(w2) + b2


if __name__ == "__main__":
    # Small but layout-friendly shapes: lane-dense dim (128), inter=512 so the
    # multi-step reduction/accumulator path can be exercised explicitly.
    batch, dim, inter_dim = 16, 128, 512

    key = jax.random.PRNGKey(0)
    kx, k1, k2, k3 = jax.random.split(key, 4)

    x = jax.random.normal(kx, (batch, dim), jnp.float32)
    w1, b1 = init_linear(k1, dim, inter_dim)
    w2, b2 = init_linear(k2, inter_dim, dim)
    w3, b3 = init_linear(k3, dim, inter_dim)

    # (a) explicit small tiles -> grid (1, 4): multi-step f32 accumulation path.
    out_multi = mlp_pallas(x, w1, b1, w2, b2, w3, b3, tm=16, tk=128)
    # (b) auto (generation-aware) tiles -> single reduction step path.
    out_auto = mlp_pallas(x, w1, b1, w2, b2, w3, b3)
    out_multi, out_auto = jax.block_until_ready((out_multi, out_auto))

    ref_q = mlp_reference_quant(x, w1, b1, w2, b2, w3, b3)
    ref_f = mlp_reference(x, w1, b1, w2, b2, w3, b3)
    for out in (out_multi, out_auto):
        assert out.shape == (batch, dim)
        assert jnp.allclose(out, ref_q, atol=2e-2, rtol=2e-2), \
            float(jnp.max(jnp.abs(out - ref_q)))
        assert jnp.allclose(out, ref_f, atol=1e-1, rtol=1e-1), \
            float(jnp.max(jnp.abs(out - ref_f)))

    print("KERNEL_OK")
</pallas_src>

<mosaic_0001>
module attributes {stable_mosaic.version = 11 : i64} {
  func.func @mlp_kernel_multi(%arg0: i32, %arg1: i32, %arg2: memref<16x128xbf16, #tpu.memory_space<vmem>>, %arg3: memref<128x256xbf16, #tpu.memory_space<vmem>>, %arg4: memref<1x256xf32, #tpu.memory_space<vmem>>, %arg5: memref<128x128xbf16, #tpu.memory_space<vmem>>, %arg6: memref<1x128xf32, #tpu.memory_space<vmem>>, %arg7: memref<16x128xf32, #tpu.memory_space<vmem>>, %arg8: memref<16x128xf32, #tpu.memory_space<vmem>>) attributes {dimension_semantics = [#tpu.dimension_semantics<parallel>, #tpu.dimension_semantics<arbitrary>], iteration_bounds = array<i64: 1, 4>, scalar_prefetch = 0 : i64, scratch_operands = 1 : i64, tpu.core_type = #tpu.core_type<tc>, window_params = [{transform_indices = @transform_0, window_bounds = array<i64: 16, 128>}, {transform_indices = @transform_1, window_bounds = array<i64: 128, 256>}, {transform_indices = @transform_2, window_bounds = array<i64: 1, 256>}, {transform_indices = @transform_3, window_bounds = array<i64: 128, 128>}, {pipeline_mode = #tpu.pipeline_mode<synchronous>, transform_indices = @transform_4, window_bounds = array<i64: 1, 128>}, {transform_indices = @transform_5, window_bounds = array<i64: 16, 128>}]} {
    %c0_i32 = arith.constant 0 : i32
    %0 = arith.cmpi eq, %arg1, %c0_i32 : i32
    %1 = arith.extui %0 : i1 to i32
    %c0_i32_0 = arith.constant 0 : i32
    %2 = arith.cmpi ne, %1, %c0_i32_0 : i32
    scf.if %2 {
      %cst_15 = arith.constant 0.000000e+00 : f32
      %27 = vector.broadcast %cst_15 : f32 to vector<16x128xf32>
      %c0_16 = arith.constant 0 : index
      %c0_17 = arith.constant 0 : index
      %28 = vector.load %arg8[%c0_16, %c0_17] : memref<16x128xf32, #tpu.memory_space<vmem>>, vector<16x128xf32>
      tpu.vector_store %arg8[%c0_16, %c0_17], %27 {strides = array<i32>} : memref<16x128xf32, #tpu.memory_space<vmem>>, vector<16x128xf32>,
    } else {
    }
    %c0 = arith.constant 0 : index
    %c0_1 = arith.constant 0 : index
    %3 = vector.load %arg8[%c0, %c0_1] : memref<16x128xf32, #tpu.memory_space<vmem>>, vector<16x128xf32>
    %c0_2 = arith.constant 0 : index
    %c0_3 = arith.constant 0 : index
    %4 = vector.load %arg2[%c0_2, %c0_3] : memref<16x128xbf16, #tpu.memory_space<vmem>>, vector<16x128xbf16>
    %c0_4 = arith.constant 0 : index
    %c0_5 = arith.constant 0 : index
    %5 = vector.load %arg3[%c0_4, %c0_5] : memref<128x256xbf16, #tpu.memory_space<vmem>>, vector<128x256xbf16>
    %cst = arith.constant dense<0.000000e+00> : vector<16x256xf32>
    %6 = tpu.matmul %4, %5, %cst {dimension_numbers = #tpu.dot_dimension_numbers<[1], [0], [0], [1], [0, 0, 1, 1], [], []>} : vector<16x128xbf16>, vector<128x256xbf16>, vector<16x256xf32> -> vector<16x256xf32>
    %c0_6 = arith.constant 0 : index
    %c0_7 = arith.constant 0 : index
    %7 = vector.load %arg4[%c0_6, %c0_7] : memref<1x256xf32, #tpu.memory_space<vmem>>, vector<1x256xf32>
    %8 = vector.broadcast %7 : vector<1x256xf32> to vector<16x256xf32>
    %9 = arith.addf %6, %8 : vector<16x256xf32>
    %10 = vector.extract_strided_slice %9 {offsets = [0, 0], sizes = [16, 128], strides = [1, 1]} : vector<16x256xf32> to vector<16x128xf32>
    %11 = vector.extract_strided_slice %9 {offsets = [0, 128], sizes = [16, 128], strides = [1, 1]} : vector<16x256xf32> to vector<16x128xf32>
    %12 = arith.negf %10 : vector<16x128xf32>
    %13 = math.exp %12 : vector<16x128xf32>
    %cst_8 = arith.constant 1.000000e+00 : f32
    %14 = vector.broadcast %cst_8 : f32 to vector<16x128xf32>
    %15 = arith.addf %14, %13 : vector<16x128xf32>
    %16 = arith.divf %14, %15 : vector<16x128xf32>
    %17 = arith.mulf %10, %16 : vector<16x128xf32>
    %18 = arith.mulf %17, %11 : vector<16x128xf32>
    %19 = arith.truncf %18 : vector<16x128xf32> to vector<16x128xbf16>
    %c0_9 = arith.constant 0 : index
    %c0_10 = arith.constant 0 : index
    %20 = vector.load %arg5[%c0_9, %c0_10] : memref<128x128xbf16, #tpu.memory_space<vmem>>, vector<128x128xbf16>
    %cst_11 = arith.constant dense<0.000000e+00> : vector<16x128xf32>
    %21 = tpu.matmul %19, %20, %cst_11 {dimension_numbers = #tpu.dot_dimension_numbers<[1], [0], [0], [1], [0, 0, 1, 1], [], []>} : vector<16x128xbf16>, vector<128x128xbf16>, vector<16x128xf32> -> vector<16x128xf32>
    %22 = arith.addf %3, %21 : vector<16x128xf32>
    %c0_12 = arith.constant 0 : index
    %c0_13 = arith.constant 0 : index
    %23 = vector.load %arg8[%c0_12, %c0_13] : memref<16x128xf32, #tpu.memory_space<vmem>>, vector<16x128xf32>
    tpu.vector_store %arg8[%c0_12, %c0_13], %22 {strides = array<i32>} : memref<16x128xf32, #tpu.memory_space<vmem>>, vector<16x128xf32>,
    %c3_i32 = arith.constant 3 : i32
    %24 = arith.cmpi eq, %arg1, %c3_i32 : i32
    %25 = arith.extui %24 : i1 to i32
    %c0_i32_14 = arith.constant 0 : i32
    %26 = arith.cmpi ne, %25, %c0_i32_14 : i32
    scf.if %26 {
      %c0_15 = arith.constant 0 : index
      %c0_16 = arith.constant 0 : index
      %27 = vector.load %arg8[%c0_15, %c0_16] : memref<16x128xf32, #tpu.memory_space<vmem>>, vector<16x128xf32>
      %c0_17 = arith.constant 0 : index
      %c0_18 = arith.constant 0 : index
      %28 = vector.load %arg6[%c0_17, %c0_18] : memref<1x128xf32, #tpu.memory_space<vmem>>, vector<1x128xf32>
      %29 = vector.broadcast %28 : vector<1x128xf32> to vector<16x128xf32>
      %30 = arith.addf %27, %29 : vector<16x128xf32>
      %c0_19 = arith.constant 0 : index
      %c0_20 = arith.constant 0 : index
      %31 = vector.load %arg7[%c0_19, %c0_20] : memref<16x128xf32, #tpu.memory_space<vmem>>, vector<16x128xf32>
      tpu.vector_store %arg7[%c0_19, %c0_20], %30 {strides = array<i32>} : memref<16x128xf32, #tpu.memory_space<vmem>>, vector<16x128xf32>,
    } else {
    }
    return
  }
  func.func @transform_0(%arg0: i32, %arg1: i32) -> (i32, i32) {
    %c0_i32 = arith.constant 0 : i32
    %c0_i32_0 = arith.constant 0 : i32
    return %arg0, %c0_i32 : i32, i32
  }
  func.func @transform_1(%arg0: i32, %arg1: i32) -> (i32, i32) {
    %c0_i32 = arith.constant 0 : i32
    %c0_i32_0 = arith.constant 0 : i32
    return %c0_i32, %arg1 : i32, i32
  }
  func.func @transform_2(%arg0: i32, %arg1: i32) -> (i32, i32) {
    %c0_i32 = arith.constant 0 : i32
    %c0_i32_0 = arith.constant 0 : i32
    return %c0_i32, %arg1 : i32, i32
  }
  func.func @transform_3(%arg0: i32, %arg1: i32) -> (i32, i32) {
    %c0_i32 = arith.constant 0 : i32
    %c0_i32_0 = arith.constant 0 : i32
    return %arg1, %c0_i32 : i32, i32
  }
  func.func @transform_4(%arg0: i32, %arg1: i32) -> (i32, i32) {
    %c0_i32 = arith.constant 0 : i32
    %c0_i32_0 = arith.constant 0 : i32
    %c0_i32_1 = arith.constant 0 : i32
    return %c0_i32, %c0_i32_0 : i32, i32
  }
  func.func @transform_5(%arg0: i32, %arg1: i32) -> (i32, i32) {
    %c0_i32 = arith.constant 0 : i32
    %c0_i32_0 = arith.constant 0 : i32
    return %arg0, %c0_i32 : i32, i32
  }
}

</mosaic_0001>

<llo_original>
// kernel: tpu_custom_call.1
$region0: #{tpu_custom_call.1}
  #allocation0 [shape = 'u32[]', space=smem, size = 0x4, offset = 0x4, fixed_abs, tag = 'smem constant byte address 0x4 - core index']
  #allocation1 [shape = 'u32[72,128]{1,0:T(1,128)}', space=vmem, size = 0x9000, scoped, tag = 'internal scratch']
  #allocation2 [shape = 'f32[16,128]{1,0:T(8,128)}', space=vmem, size = 0x2000, scoped, tag = 'scratch operand']
  %s0 = inlined_call_operand.hbm [shape: bf16[16,128], index: 0, kind: input, shape index: {}]
  %s1 = inlined_call_operand.hbm [shape: bf16[128,1024], index: 1, kind: input, shape index: {}]
  %s2 = inlined_call_operand.hbm [shape: f32[1,1024], index: 2, kind: input, shape index: {}]
  %s3 = inlined_call_operand.hbm [shape: bf16[512,128], index: 3, kind: input, shape index: {}]
  %s4 = inlined_call_operand.vmem [shape: f32[1,128], index: 4, kind: input, shape index: {}]
  %s5 = inlined_call_operand.hbm [shape: f32[16,128], index: 5, kind: output, shape index: {}]
  %s6 = sld [smem:[#allocation0]]
  $region77: #{tpu_custom_call.1} parent=0
    _
  %s8 = ssub.s32 1, %s6
  %s9 = scalar_select 0, %s8, %s6
  $region1: #{tpu_custom_call.1} parent=0
    #allocation3 [shape = 'u8[4096]{0}', space=vmem, size = 0x1000, scoped, tag = 'input window, operand 0, single buffered']
    #allocation4 [shape = 's32[2]{0}', space=sflag, size = 0x8, scoped, tag = 'scoped memory for tpu_custom_call.1']
    #allocation5 [shape = 's32[2]{0}', space=sflag, size = 0x8, scoped, tag = 'scoped memory for tpu_custom_call.1']
    #allocation6 [shape = 'u8[131072]{0}', space=vmem, size = 0x20000, scoped, tag = 'input window, operand 1']
    #allocation7 [shape = 's32[2]{0}', space=sflag, size = 0x8, scoped, tag = 'scoped memory for tpu_custom_call.1']
    #allocation8 [shape = 'u8[2048]{0}', space=vmem, size = 0x800, scoped, tag = 'input window, operand 2']
    #allocation9 [shape = 'u8[65536]{0}', space=vmem, size = 0x10000, scoped, tag = 'input window, operand 3']
    #allocation10 [shape = 's32[2]{0}', space=sflag, size = 0x8, scoped, tag = 'scoped memory for tpu_custom_call.1']
    #allocation11 [shape = 'u8[8192]{0}', space=vmem, size = 0x2000, scoped, tag = 'output window, operand 0, single buffered']
    %10 = vsyncpa [#allocation4], 0
    %11 = vsyncpa [#allocation7], 0
    %s12 = scalar_lea.sflag [#allocation7], 1
    %13 = vsyncpa %s12, 0
    %14 = vsyncpa [#allocation10], 0
    %s15 = scalar_lea.sflag [#allocation10], 1
    %16 = vsyncpa %s15, 0
    %17 = vsyncpa [#allocation5], 0
    loop: start=0, step=1, limit=6
    $region2: #{tpu_custom_call.1} parent=1 // loop_pre_header
      _
    $region3: #{tpu_custom_call.1} parent=1 // loop_header
      %s19 = sphi 0, %s23
      %p20 = scmp.ge.s32.totalorder %s19, 6
      %s26 = sphi 0, %s38
      %s27 = sphi 0, %s34
      %s28 = sphi 0, %s26
      %s29 = sphi 0, %s27
      %s30 = sphi 0, %s28
      %s31 = sphi 0, %s29
      %s41 = sphi 0, %s43
      %s44 = sphi 0, %s41
      %s45 = sphi 0, %s44
      %s61 = sphi 0, %s45
      %s67 = sphi 0, %s69
      %s70 = sphi 0, %s67
      %s71 = sphi 0, %s70
      %s87 = sphi 0, %s71
      %s93 = sphi 0, %s95
      %s96 = sphi 0, %s93
      %s97 = sphi 0, %s96
      %s113 = sphi 0, %s97
      %s119 = sphi 0, %s121
      %s122 = sphi 0, %s119
      %s123 = sphi 0, %s122
      %s139 = sphi 0, %s123
      %s143 = sphi 0, %s143
      %s145 = sphi 0, %s143
      %s146 = sphi 0, %s145
      %s160 = sphi 0, %s146
      %s166 = sphi 0, %s168
      %s169 = sphi 0, %s166
      %s170 = sphi 0, %s169
      %s186 = sphi 0, %s170
    $region4: #{tpu_custom_call.1} parent=1 // loop_header_branch
      %22 = sbr.rel (%p20) target = $region8
    $region5: #{tpu_custom_call.1} parent=1 // loop_body
      %s24 = ssub.s32 %s19, 1
      %s25 = ssub.s32 %s19, 2
      %s32 = sadd.s32 1, %s27
      %p33 = scmp.ge.s32.totalorder %s32, 4
      %s34 = scalar_select %p33, 0, %s32
      %s35 = sadd.s32 1, %s26
      %s36 = scalar_select %p33, %s35, %s26
      %p37 = scmp.ge.s32.totalorder %s36, 1
      %s38 = scalar_select %p37, 0, %s36
      %s39 = ssub.s32 %s26, %s38
      %p40 = scmp.eq.s32.totalorder %s39, 0
      %s42 = sadd.s32 %s41, 1
      %s43 = scalar_select %p40, %s41, %s42
      %p46 = pneg %p40
      %p47 = scmp.eq.s32.totalorder %s19, 3
      %p48 = por %p46, %p47
      %p49 = scmp.ne.s32.totalorder %s41, %s44
      %p50 = scmp.eq.s32.totalorder %s19, 0
      %p51 = por %p49, %p50
      %p52 = scmp.ne.s32.totalorder %s41, %s44
      %p53 = scmp.eq.s32.totalorder %s24, 3
      %p54 = por %p52, %p53
      %p55 = scmp.ne.s32.totalorder %s44, %s45
      %p56 = scmp.eq.s32.totalorder %s24, 0
      %p57 = por %p55, %p56
      %p58 = scmp.ne.s32.totalorder %s44, %s45
      %p59 = scmp.eq.s32.totalorder %s25, 3
      %p60 = por %p58, %p59
      %p62 = scmp.ne.s32.totalorder %s45, %s61
      %p63 = scmp.eq.s32.totalorder %s25, 0
      %p64 = por %p62, %p63
      %s65 = ssub.s32 %s27, %s34
      %p66 = scmp.eq.s32.totalorder %s65, 0
      %s68 = sadd.s32 %s67, 1
      %s69 = scalar_select %p66, %s67, %s68
      %p72 = pneg %p66
      %p73 = scmp.eq.s32.totalorder %s19, 3
      %p74 = por %p72, %p73
      %p75 = scmp.ne.s32.totalorder %s67, %s70
      %p76 = scmp.eq.s32.totalorder %s19, 0
      %p77 = por %p75, %p76
      %p78 = scmp.ne.s32.totalorder %s67, %s70
      %p79 = scmp.eq.s32.totalorder %s24, 3
      %p80 = por %p78, %p79
      %p81 = scmp.ne.s32.totalorder %s70, %s71
      %p82 = scmp.eq.s32.totalorder %s24, 0
      %p83 = por %p81, %p82
      %p84 = scmp.ne.s32.totalorder %s70, %s71
      %p85 = scmp.eq.s32.totalorder %s25, 3
      %p86 = por %p84, %p85
      %p88 = scmp.ne.s32.totalorder %s71, %s87
      %p89 = scmp.eq.s32.totalorder %s25, 0
      %p90 = por %p88, %p89
      %s91 = ssub.s32 %s27, %s34
      %p92 = scmp.eq.s32.totalorder %s91, 0
      %s94 = sadd.s32 %s93, 1
      %s95 = scalar_select %p92, %s93, %s94
      %p98 = pneg %p92
      %p99 = scmp.eq.s32.totalorder %s19, 3
      %p100 = por %p98, %p99
      %p101 = scmp.ne.s32.totalorder %s93, %s96
      %p102 = scmp.eq.s32.totalorder %s19, 0
      %p103 = por %p101, %p102
      %p104 = scmp.ne.s32.totalorder %s93, %s96
      %p105 = scmp.eq.s32.totalorder %s24, 3
      %p106 = por %p104, %p105
      %p107 = scmp.ne.s32.totalorder %s96, %s97
      %p108 = scmp.eq.s32.totalorder %s24, 0
      %p109 = por %p107, %p108
      %p110 = scmp.ne.s32.totalorder %s96, %s97
      %p111 = scmp.eq.s32.totalorder %s25, 3
      %p112 = por %p110, %p111
      %p114 = scmp.ne.s32.totalorder %s97, %s113
      %p115 = scmp.eq.s32.totalorder %s25, 0
      %p116 = por %p114, %p115
      %s117 = ssub.s32 %s27, %s34
      %p118 = scmp.eq.s32.totalorder %s117, 0
      %s120 = sadd.s32 %s119, 1
      %s121 = scalar_select %p118, %s119, %s120
      %p124 = pneg %p118
      %p125 = scmp.eq.s32.totalorder %s19, 3
      %p126 = por %p124, %p125
      %p127 = scmp.ne.s32.totalorder %s119, %s122
      %p128 = scmp.eq.s32.totalorder %s19, 0
      %p129 = por %p127, %p128
      %p130 = scmp.ne.s32.totalorder %s119, %s122
      %p131 = scmp.eq.s32.totalorder %s24, 3
      %p132 = por %p130, %p131
      %p133 = scmp.ne.s32.totalorder %s122, %s123
      %p134 = scmp.eq.s32.totalorder %s24, 0
      %p135 = por %p133, %p134
      %p136 = scmp.ne.s32.totalorder %s122, %s123
      %p137 = scmp.eq.s32.totalorder %s25, 3
      %p138 = por %p136, %p137
      %p140 = scmp.ne.s32.totalorder %s123, %s139
      %p141 = scmp.eq.s32.totalorder %s25, 0
      %p142 = por %p140, %p141
      %s144 = sadd.s32 %s143, 1
      %p147 = scmp.eq.s32.totalorder %s19, 3
      %p148 = scmp.ne.s32.totalorder %s143, %s145
      %p149 = scmp.eq.s32.totalorder %s19, 0
      %p150 = por %p148, %p149
      %p151 = scmp.ne.s32.totalorder %s143, %s145
      %p152 = scmp.eq.s32.totalorder %s24, 3
      %p153 = por %p151, %p152
      %p154 = scmp.ne.s32.totalorder %s145, %s146
      %p155 = scmp.eq.s32.totalorder %s24, 0
      %p156 = por %p154, %p155
      %p157 = scmp.ne.s32.totalorder %s145, %s146
      %p158 = scmp.eq.s32.totalorder %s25, 3
      %p159 = por %p157, %p158
      %p161 = scmp.ne.s32.totalorder %s146, %s160
      %p162 = scmp.eq.s32.totalorder %s25, 0
      %p163 = por %p161, %p162
      %s164 = ssub.s32 %s26, %s38
      %p165 = scmp.eq.s32.totalorder %s164, 0
      %s167 = sadd.s32 %s166, 1
      %s168 = scalar_select %p165, %s166, %s167
      %p171 = pneg %p165
      %p172 = scmp.eq.s32.totalorder %s19, 3
      %p173 = por %p171, %p172
      %p174 = scmp.ne.s32.totalorder %s166, %s169
      %p175 = scmp.eq.s32.totalorder %s19, 0
      %p176 = por %p174, %p175
      %p177 = scmp.ne.s32.totalorder %s166, %s169
      %p178 = scmp.eq.s32.totalorder %s24, 3
      %p179 = por %p177, %p178
      %p180 = scmp.ne.s32.totalorder %s169, %s170
      %p181 = scmp.eq.s32.totalorder %s24, 0
      %p182 = por %p180, %p181
      %p183 = scmp.ne.s32.totalorder %s169, %s170
      %p184 = scmp.eq.s32.totalorder %s25, 3
      %p185 = por %p183, %p184
      %p187 = scmp.ne.s32.totalorder %s170, %s186
      %p188 = scmp.eq.s32.totalorder %s25, 0
      %p189 = por %p187, %p188
      %p190 = scmp.le.s32.totalorder 1, %s19
      %p191 = scmp.lt.s32.totalorder %s19, 5
      %p192 = pnand %p190, %p191
      %p193 = pneg %p192
      // Predicated region
      $region9: #{tpu_custom_call.1} parent=5 // pred_check
        _
      $region10: #{tpu_custom_call.1} parent=5 // pred_check_branch
        %195 = sbr.rel (%p192) target = $region12
      $region11: #{tpu_custom_call.1} parent=5 // pred_region
        %s196 = ssub.s32 %s19, 1
        // Predicated region
        $region13: #{tpu_custom_call.1} parent=11 // pred_check
          %p197 = pneg %p57
        $region14: #{tpu_custom_call.1} parent=11 // pred_check_branch
          %199 = sbr.rel (%p197) target = $region16
        $region15: #{tpu_custom_call.1} parent=11 // pred_region
          %s200 = smul.u32 2, %s28
          %202 = vsyncadd [#allocation4], 0
          %s203 = smul.addr %s200, 4
          %s204 = scalar_lea.hbm %s0, %s203
          %s205 = sshll.u32 %s204, 4
          %s206 = int_to_ptr.hbm [resolvable:$true] %s205
          %s207 = sshll.u32 [#allocation3], 4
          %s208 = int_to_ptr.vmem [resolvable:$true] %s207
          %213 = dma.hbm_to_vmem [thread:$0]  %s206, 128, %s208, [#allocation4], 64, 64, 4
        $region16: #{tpu_custom_call.1} parent=11 // pred_fallthru
          _
        // Predicated region
        $region17: #{tpu_custom_call.1} parent=11 // pred_check
          %p214 = pneg %p156
        $region18: #{tpu_custom_call.1} parent=11 // pred_check_branch
          %216 = sbr.rel (%p214) target = $region20
        $region19: #{tpu_custom_call.1} parent=11 // pred_region
          _
        $region20: #{tpu_custom_call.1} parent=11 // pred_fallthru
          _
      $region12: #{tpu_custom_call.1} parent=5 // pred_fallthru
        _
      %p217 = scmp.lt.s32.totalorder %s19, 4
      // Predicated region
      $region21: #{tpu_custom_call.1} parent=5 // pred_check
        %p218 = pneg %p217
      $region22: #{tpu_custom_call.1} parent=5 // pred_check_branch
        %220 = sbr.rel (%p218) target = $region24
      $region23: #{tpu_custom_call.1} parent=5 // pred_region
        // Predicated region
        $region25: #{tpu_custom_call.1} parent=23 // pred_check
          %p221 = pneg %p77
        $region26: #{tpu_custom_call.1} parent=23 // pred_check_branch
          %223 = sbr.rel (%p221) target = $region28
        $region27: #{tpu_custom_call.1} parent=23 // pred_region
          %s224 = sand.u32 %s19, 1
          %s225 = scalar_lea.sflag [#allocation7], %s224
          %s226 = sand.u32 %s67, 1
          %s227 = smul.addr %s226, 128
          %s228 = scalar_lea.vmem [#allocation6], %s227
          %s229 = smul.u32 2, %s27
          %231 = vsyncadd %s225, 0
          %s232 = smul.addr %s229, 4
          %s233 = scalar_lea.hbm %s1, %s232
          %s234 = sshll.u32 %s233, 4
          %s235 = int_to_ptr.hbm [resolvable:$true] %s234
          %s236 = sshll.u32 %s228, 4
          %s237 = int_to_ptr.vmem [resolvable:$true] %s236
          %242 = dma.hbm_to_vmem [thread:$0]  %s235, 2048, %s237, %s225, 512, 128, 8
        $region28: #{tpu_custom_call.1} parent=23 // pred_fallthru
          _
        // Predicated region
        $region29: #{tpu_custom_call.1} parent=23 // pred_check
          %p243 = pneg %p103
        $region30: #{tpu_custom_call.1} parent=23 // pred_check_branch
          %245 = sbr.rel (%p243) target = $region32
        $region31: #{tpu_custom_call.1} parent=23 // pred_region
          %s246 = sand.u32 %s19, 1
          %s247 = scalar_lea.sflag [#allocation7], %s246
          %s248 = sand.u32 %s93, 1
          %s249 = smul.addr %s248, 2
          %s250 = scalar_lea.vmem [#allocation8], %s249
          %s251 = smul.u32 2, %s27
          %253 = vsyncadd %s247, 0
          %s254 = scalar_lea.hbm %s2, %s251
          %s256 = sshll.u32 %s254, 4
          %s257 = int_to_ptr.hbm [resolvable:$true] %s256
          %s258 = sshll.u32 %s250, 4
          %s259 = int_to_ptr.vmem [resolvable:$true] %s258
          %261 = dma.hbm_to_vmem [thread:$0]  %s257, 32, %s259, %s247
        $region32: #{tpu_custom_call.1} parent=23 // pred_fallthru
          _
        // Predicated region
        $region33: #{tpu_custom_call.1} parent=23 // pred_check
          %p262 = pneg %p129
        $region34: #{tpu_custom_call.1} parent=23 // pred_check_branch
          %264 = sbr.rel (%p262) target = $region36
        $region35: #{tpu_custom_call.1} parent=23 // pred_region
          %s265 = sand.u32 %s119, 1
          %s266 = scalar_lea.sflag [#allocation10], %s265
          %s267 = sand.u32 %s119, 1
          %s268 = smul.addr %s267, 64
          %s269 = scalar_lea.vmem [#allocation9], %s268
          %s270 = smul.u32 16, %s27
          %272 = vsyncadd %s266, 0
          %s273 = smul.addr %s270, 4
          %s274 = scalar_lea.hbm %s3, %s273
          %s275 = sshll.u32 %s274, 4
          %s276 = int_to_ptr.hbm [resolvable:$true] %s275
          %s277 = sshll.u32 %s269, 4
          %s278 = int_to_ptr.vmem [resolvable:$true] %s277
          %283 = dma.hbm_to_vmem [thread:$0]  %s276, 1024, %s278, %s266, 64, 64, 4
        $region36: #{tpu_custom_call.1} parent=23 // pred_fallthru
          _
      $region24: #{tpu_custom_call.1} parent=5 // pred_fallthru
        _
      %p284 = scmp.le.s32.totalorder 1, %s19
      %p285 = scmp.lt.s32.totalorder %s19, 5
      %p286 = pnand %p284, %p285
      %p287 = pneg %p286
      // Predicated region
      $region37: #{tpu_custom_call.1} parent=5 // pred_check
        _
      $region38: #{tpu_custom_call.1} parent=5 // pred_check_branch
        %289 = sbr.rel (%p286) target = $region40
      $region39: #{tpu_custom_call.1} parent=5 // pred_region
        %s290 = ssub.s32 %s19, 1
        // Predicated region
        $region41: #{tpu_custom_call.1} parent=39 // pred_check
          %p291 = pneg %p57
        $region42: #{tpu_custom_call.1} parent=39 // pred_check_branch
          %293 = sbr.rel (%p291) target = $region44
        $region43: #{tpu_custom_call.1} parent=39 // pred_region
          %295 = dma.done [#allocation4], 128
        $region44: #{tpu_custom_call.1} parent=39 // pred_fallthru
          _
        %s296 = sand.u32 %s24, 1
        %s297 = scalar_lea.sflag [#allocation7], %s296
        %s298 = sand.u32 %s70, 1
        %s299 = smul.addr %s298, 128
        %s300 = scalar_lea.vmem [#allocation6], %s299
        // Predicated region
        $region45: #{tpu_custom_call.1} parent=39 // pred_check
          %p301 = pneg %p83
        $region46: #{tpu_custom_call.1} parent=39 // pred_check_branch
          %303 = sbr.rel (%p301) target = $region48
        $region47: #{tpu_custom_call.1} parent=39 // pred_region
          %305 = dma.done %s297, 2048
        $region48: #{tpu_custom_call.1} parent=39 // pred_fallthru
          _
        %s306 = sand.u32 %s24, 1
        %s307 = scalar_lea.sflag [#allocation7], %s306
        %s308 = sand.u32 %s96, 1
        %s309 = smul.addr %s308, 2
        %s310 = scalar_lea.vmem [#allocation8], %s309
        // Predicated region
        $region49: #{tpu_custom_call.1} parent=39 // pred_check
          %p311 = pneg %p109
        $region50: #{tpu_custom_call.1} parent=39 // pred_check_branch
          %313 = sbr.rel (%p311) target = $region52
        $region51: #{tpu_custom_call.1} parent=39 // pred_region
          %315 = dma.done %s307, 32
        $region52: #{tpu_custom_call.1} parent=39 // pred_fallthru
          _
        %s316 = sand.u32 %s122, 1
        %s317 = scalar_lea.sflag [#allocation10], %s316
        %s318 = sand.u32 %s122, 1
        %s319 = smul.addr %s318, 64
        %s320 = scalar_lea.vmem [#allocation9], %s319
        // Predicated region
        $region53: #{tpu_custom_call.1} parent=39 // pred_check
          %p321 = pneg %p135
        $region54: #{tpu_custom_call.1} parent=39 // pred_check_branch
          %323 = sbr.rel (%p321) target = $region56
        $region55: #{tpu_custom_call.1} parent=39 // pred_region
          %325 = dma.done %s317, 1024
        $region56: #{tpu_custom_call.1} parent=39 // pred_fallthru
          _
        %p326 = pneg %p57
        %p327 = pneg %p54
        %s328 = sand.u32 %s24, 1
        %s329 = scalar_lea.sflag [#allocation7], %s328
        %s330 = sand.u32 %s70, 1
        %s331 = smul.addr %s330, 128
        %s332 = scalar_lea.vmem [#allocation6], %s331
        %p333 = pneg %p83
        %p334 = pneg %p80
        %s335 = sand.u32 %s24, 1
        %s336 = scalar_lea.sflag [#allocation7], %s335
        %s337 = sand.u32 %s96, 1
        %s338 = smul.addr %s337, 2
        %s339 = scalar_lea.vmem [#allocation8], %s338
        %p340 = pneg %p109
        %p341 = pneg %p106
        %s342 = sand.u32 %s122, 1
        %s343 = scalar_lea.sflag [#allocation10], %s342
        %s344 = sand.u32 %s122, 1
        %s345 = smul.addr %s344, 64
        %s346 = scalar_lea.vmem [#allocation9], %s345
        %p347 = pneg %p135
        %p348 = pneg %p132
        %p349 = pneg %p156
        %p350 = pneg %p153
        %p351 = pneg %p182
        %p352 = pneg %p179
        %s353 = smul.u32 2, %s28
        %s354 = smul.u32 2, %s29
        %s355 = smul.u32 2, %s29
        %s356 = smul.u32 16, %s29
        %s357 = smul.u32 2, %s28
        %p358 = scmp.eq.s32.totalorder %s29, 0
        // Predicated region
        $region57: #{tpu_custom_call.1} parent=39 // pred_check
          %p359 = pneg %p358
        $region58: #{tpu_custom_call.1} parent=39 // pred_check_branch
          %361 = sbr.rel (%p359) target = $region60
        $region59: #{tpu_custom_call.1} parent=39 // pred_region
          %362 = vst [vmem:[#allocation2] sm:$0xff] 0.0
          %363 = vst [vmem:[#allocation2 + $0x8] sm:$0xff] 0.0
        $region60: #{tpu_custom_call.1} parent=39 // pred_fallthru
          _
        %v364 = vld [vmem:[#allocation2] sm:$0xff]
        %v365 = vld [vmem:[#allocation2 + $0x8] sm:$0xff]
        %v366 = vld [vmem:[#allocation3] sm:$0xf]
        %v367 = vld [vmem:[#allocation3 + $0x4] sm:$0xf]
        %v368 = vld [vmem:[%s300] sm:$0xff]
        %v369 = vld [vmem:[%s300 + $0x8] sm:$0xff]
        %v370 = vld [vmem:[%s300 + $0x10] sm:$0xff]
        %v371 = vld [vmem:[%s300 + $0x18] sm:$0xff]
        %v372 = vld [vmem:[%s300 + $0x20] sm:$0xff]
        %v373 = vld [vmem:[%s300 + $0x28] sm:$0xff]
        %v374 = vld [vmem:[%s300 + $0x30] sm:$0xff]
        %v375 = vld [vmem:[%s300 + $0x38] sm:$0xff]
        %v376 = vld [vmem:[%s300 + $0x40] sm:$0xff]
        %v377 = vld [vmem:[%s300 + $0x48] sm:$0xff]
        %v378 = vld [vmem:[%s300 + $0x50] sm:$0xff]
        %v379 = vld [vmem:[%s300 + $0x58] sm:$0xff]
        %v380 = vld [vmem:[%s300 + $0x60] sm:$0xff]
        %v381 = vld [vmem:[%s300 + $0x68] sm:$0xff]
        %v382 = vld [vmem:[%s300 + $0x70] sm:$0xff]
        %v383 = vld [vmem:[%s300 + $0x78] sm:$0xff]
        %v384 = vld [vmem:[%s310] sm:$0x3]
        %v386 = vperm.slane %v384, 0
        %v387 = vperm.slane %v384, 1
        %v392 = vunpack.c.l.b16 %v366
        %v393 = vunpack.c.l.b16 %v367
        %v394 = vpack.c.b16 %v393, %v392
        %v412 = vunpack.c.l.b16 %v368
        %v413 = vunpack.c.h.b16 %v368
        %v414 = vunpack.c.l.b16 %v369
        %v415 = vunpack.c.h.b16 %v369
        %v416 = vunpack.c.l.b16 %v370
        %v417 = vunpack.c.h.b16 %v370
        %v418 = vunpack.c.l.b16 %v371
        %v419 = vunpack.c.h.b16 %v371
        %v420 = vunpack.c.l.b16 %v372
        %v421 = vunpack.c.h.b16 %v372
        %v422 = vunpack.c.l.b16 %v373
        %v423 = vunpack.c.h.b16 %v373
        %v424 = vunpack.c.l.b16 %v374
        %v425 = vunpack.c.h.b16 %v374
        %v426 = vunpack.c.l.b16 %v375
        %v427 = vunpack.c.h.b16 %v375
        %v428 = vunpack.c.l.b16 %v376
        %v429 = vunpack.c.h.b16 %v376
        %v430 = vunpack.c.l.b16 %v377
        %v431 = vunpack.c.h.b16 %v377
        %v432 = vunpack.c.l.b16 %v378
        %v433 = vunpack.c.h.b16 %v378
        %v434 = vunpack.c.l.b16 %v379
        %v435 = vunpack.c.h.b16 %v379
        %v436 = vunpack.c.l.b16 %v380
        %v437 = vunpack.c.h.b16 %v380
        %v438 = vunpack.c.l.b16 %v381
        %v439 = vunpack.c.h.b16 %v381
        %v440 = vunpack.c.l.b16 %v382
        %v441 = vunpack.c.h.b16 %v382
        %v442 = vunpack.c.l.b16 %v383
        %v443 = vunpack.c.h.b16 %v383
        %v444 = vpack.c.b16 %v414, %v412
        %v445 = vpack.c.b16 %v415, %v413
        %v446 = vpack.c.b16 %v418, %v416
        %v447 = vpack.c.b16 %v419, %v417
        %v448 = vpack.c.b16 %v422, %v420
        %v449 = vpack.c.b16 %v423, %v421
        %v450 = vpack.c.b16 %v426, %v424
        %v451 = vpack.c.b16 %v427, %v425
        %v452 = vpack.c.b16 %v430, %v428
        %v453 = vpack.c.b16 %v431, %v429
        %v454 = vpack.c.b16 %v434, %v432
        %v455 = vpack.c.b16 %v435, %v433
        %v456 = vpack.c.b16 %v438, %v436
        %v457 = vpack.c.b16 %v439, %v437
        %v458 = vpack.c.b16 %v442, %v440
        %v459 = vpack.c.b16 %v443, %v441
        %476 = vmatpush.bf16.msra.mxu0 %v458
        %477 = vmatpush.bf16.msra.mxu0 %v456
        %478 = vmatpush.bf16.msra.mxu0 %v454
        %479 = vmatpush.bf16.msra.mxu0 %v452
        %480 = vmatpush.bf16.msra.mxu0 %v450
        %481 = vmatpush.bf16.msra.mxu0 %v448
        %482 = vmatpush.bf16.msra.mxu0 %v446
        %483 = vmatpush.bf16.msra.mxu0 %v444
        %484 = vmatmul.bf16.gmra.mxu0 %v394
        %v485 = vpop.f32.mrf.mxu0
        %v486 = vadd.f32 %v386, %v485
        %v487 = vpop.f32.mrf.mxu0
        %v488 = vadd.f32 %v386, %v487
        %489 = vdwg.mxu0
        %490 = vmatpush.bf16.msra.mxu0 %v459
        %491 = vmatpush.bf16.msra.mxu0 %v457
        %492 = vmatpush.bf16.msra.mxu0 %v455
        %493 = vmatpush.bf16.msra.mxu0 %v453
        %494 = vmatpush.bf16.msra.mxu0 %v451
        %495 = vmatpush.bf16.msra.mxu0 %v449
        %496 = vmatpush.bf16.msra.mxu0 %v447
        %497 = vmatpush.bf16.msra.mxu0 %v445
        %498 = vmatmul.bf16.gmra.mxu0 %v394
        %v499 = vpop.f32.mrf.mxu0
        %v500 = vadd.f32 %v387, %v499
        %v501 = vpop.f32.mrf.mxu0
        %v502 = vadd.f32 %v387, %v501
        %503 = vdwg.mxu0
        %v504 = vxor.u32 %v486, 2147483648
        %v505 = vxor.u32 %v488, 2147483648
        %v506 = vmul.f32 %v504, 1.442695
        %v507 = vpow.pop %v506
        %v508 = vmul.f32 %v505, 1.442695
        %v509 = vpow.pop %v508
        %v510 = vadd.f32 %v507, 1.0
        %v511 = vadd.f32 %v509, 1.0
        %v512 = vrcp.pop %v510
        %v513 = vmul.f32 %v510, %v512
        %v514 = vsub.f32 1.0, %v513
        %v515 = vmul.f32 %v512, %v514
        %v516 = vadd.f32 %v512, %v515
        %vm517 = vweird.f32 %v510
        %vm518 = vweird.f32 %v512
        %vm519 = vmor %vm517, %vm518
        %v520 = vsel %vm519, %v512, %v516
        %v521 = vand.u32 2147483647, %v510
        %vm522 = vcmp.eq.f32.partialorder %v521, 8.507059e+37
        %v523 = vand.u32 %v510, 2147483648
        %v524 = vor.u32 1.1754944e-38, %v523
        %v525 = vsel %vm522, %v524, %v520
        %v526 = vmul.f32 1.0, %v525
        %v527 = vrcp.pop %v511
        %v528 = vmul.f32 %v511, %v527
        %v529 = vsub.f32 1.0, %v528
        %v530 = vmul.f32 %v527, %v529
        %v531 = vadd.f32 %v527, %v530
        %vm532 = vweird.f32 %v511
        %vm533 = vweird.f32 %v527
        %vm534 = vmor %vm532, %vm533
        %v535 = vsel %vm534, %v527, %v531
        %v536 = vand.u32 2147483647, %v511
        %vm537 = vcmp.eq.f32.partialorder %v536, 8.507059e+37
        %v538 = vand.u32 %v511, 2147483648
        %v539 = vor.u32 1.1754944e-38, %v538
        %v540 = vsel %vm537, %v539, %v535
        %v541 = vmul.f32 1.0, %v540
        %v542 = vmul.f32 %v486, %v526
        %v543 = vmul.f32 %v488, %v541
        %v544 = vmul.f32 %v542, %v500
        %v545 = vmul.f32 %v543, %v502
        %v546 = vpack.c.bf16 %v545, %v544
        %v547 = vld [vmem:[%s320] sm:$0xf]
        %v548 = vld [vmem:[%s320 + $0x4] sm:$0xf]
        %v549 = vld [vmem:[%s320 + $0x8] sm:$0xf]
        %v550 = vld [vmem:[%s320 + $0xc] sm:$0xf]
        %v551 = vld [vmem:[%s320 + $0x10] sm:$0xf]
        %v552 = vld [vmem:[%s320 + $0x14] sm:$0xf]
        %v553 = vld [vmem:[%s320 + $0x18] sm:$0xf]
        %v554 = vld [vmem:[%s320 + $0x1c] sm:$0xf]
        %v555 = vld [vmem:[%s320 + $0x20] sm:$0xf]
        %v556 = vld [vmem:[%s320 + $0x24] sm:$0xf]
        %v557 = vld [vmem:[%s320 + $0x28] sm:$0xf]
        %v558 = vld [vmem:[%s320 + $0x2c] sm:$0xf]
        %v559 = vld [vmem:[%s320 + $0x30] sm:$0xf]
        %v560 = vld [vmem:[%s320 + $0x34] sm:$0xf]
        %v561 = vld [vmem:[%s320 + $0x38] sm:$0xf]
        %v562 = vld [vmem:[%s320 + $0x3c] sm:$0xf]
        %v579 = vunpack.c.l.b16 %v547
        %v580 = vunpack.c.l.b16 %v548
        %v581 = vunpack.c.l.b16 %v549
        %v582 = vunpack.c.l.b16 %v550
        %v583 = vunpack.c.l.b16 %v551
        %v584 = vunpack.c.l.b16 %v552
        %v585 = vunpack.c.l.b16 %v553
        %v586 = vunpack.c.l.b16 %v554
        %v587 = vunpack.c.l.b16 %v555
        %v588 = vunpack.c.l.b16 %v556
        %v589 = vunpack.c.l.b16 %v557
        %v590 = vunpack.c.l.b16 %v558
        %v591 = vunpack.c.l.b16 %v559
        %v592 = vunpack.c.l.b16 %v560
        %v593 = vunpack.c.l.b16 %v561
        %v594 = vunpack.c.l.b16 %v562
        %v595 = vpack.c.b16 %v580, %v579
        %v596 = vpack.c.b16 %v582, %v581
        %v597 = vpack.c.b16 %v584, %v583
        %v598 = vpack.c.b16 %v586, %v585
        %v599 = vpack.c.b16 %v588, %v587
        %v600 = vpack.c.b16 %v590, %v589
        %v601 = vpack.c.b16 %v592, %v591
        %v602 = vpack.c.b16 %v594, %v593
        %611 = vmatpush.bf16.msra.mxu0 %v602
        %612 = vmatpush.bf16.msra.mxu0 %v601
        %613 = vmatpush.bf16.msra.mxu0 %v600
        %614 = vmatpush.bf16.msra.mxu0 %v599
        %615 = vmatpush.bf16.msra.mxu0 %v598
        %616 = vmatpush.bf16.msra.mxu0 %v597
        %617 = vmatpush.bf16.msra.mxu0 %v596
        %618 = vmatpush.bf16.msra.mxu0 %v595
        %619 = vmatmul.bf16.gmra.mxu0 %v546
        %v620 = vpop.f32.mrf.mxu0
        %v621 = vadd.f32 0.0, %v620
        %v622 = vpop.f32.mrf.mxu0
        %v623 = vadd.f32 0.0, %v622
        %624 = vdwg.mxu0
        %v625 = vadd.f32 %v364, %v621
        %v626 = vadd.f32 %v365, %v623
        %627 = vst [vmem:[#allocation2] sm:$0xff] %v625
        %628 = vst [vmem:[#allocation2 + $0x8] sm:$0xff] %v626
        %p629 = scmp.eq.s32.totalorder %s29, 3
        // Predicated region
        $region61: #{tpu_custom_call.1} parent=39 // pred_check
          %p630 = pneg %p629
        $region62: #{tpu_custom_call.1} parent=39 // pred_check_branch
          %632 = sbr.rel (%p630) target = $region64
        $region63: #{tpu_custom_call.1} parent=39 // pred_region
          %v633 = vld [vmem:[#allocation2] sm:$0xff]
          %v634 = vld [vmem:[#allocation2 + $0x8] sm:$0xff]
          %v635 = vld [vmem:[%s4] sm:$0x1]
          %v637 = vperm.slane %v635, 0
          %v639 = vadd.f32 %v633, %v637
          %v640 = vadd.f32 %v634, %v637
          %641 = vst [vmem:[#allocation11] sm:$0xff] %v639
          %642 = vst [vmem:[#allocation11 + $0x8] sm:$0xff] %v640
        $region64: #{tpu_custom_call.1} parent=39 // pred_fallthru
          _
        // Predicated region
        $region65: #{tpu_custom_call.1} parent=39 // pred_check
          %p643 = pneg %p179
        $region66: #{tpu_custom_call.1} parent=39 // pred_check_branch
          %645 = sbr.rel (%p643) target = $region68
        $region67: #{tpu_custom_call.1} parent=39 // pred_region
          %s646 = smul.u32 2, %s28
          %648 = vsyncadd [#allocation5], 0
          %s649 = smul.addr %s646, 8
          %s650 = scalar_lea.hbm %s5, %s649
          %s651 = sshll.u32 [#allocation11], 4
          %s652 = int_to_ptr.vmem [resolvable:$true] %s651
          %s653 = sshll.u32 %s650, 4
          %s654 = int_to_ptr.hbm [resolvable:$true] %s653
          %659 = dma.vmem_to_hbm [thread:$0]  %s652, 256, %s654, [#allocation5], 128, 128, 8
        $region68: #{tpu_custom_call.1} parent=39 // pred_fallthru
          _
        // Predicated region
        $region69: #{tpu_custom_call.1} parent=39 // pred_check
          %p660 = pneg %p179
        $region70: #{tpu_custom_call.1} parent=39 // pred_check_branch
          %662 = sbr.rel (%p660) target = $region72
        $region71: #{tpu_custom_call.1} parent=39 // pred_region
          %664 = dma.done [#allocation5], 256
        $region72: #{tpu_custom_call.1} parent=39 // pred_fallthru
          _
      $region40: #{tpu_custom_call.1} parent=5 // pred_fallthru
        _
      %p665 = scmp.le.s32.totalorder 2, %s19
      // Predicated region
      $region73: #{tpu_custom_call.1} parent=5 // pred_check
        %p666 = pneg %p665
      $region74: #{tpu_custom_call.1} parent=5 // pred_check_branch
        %668 = sbr.rel (%p666) target = $region76
      $region75: #{tpu_custom_call.1} parent=5 // pred_region
        %s669 = ssub.s32 %s19, 2
      $region76: #{tpu_custom_call.1} parent=5 // pred_fallthru
        _
    $region6: #{tpu_custom_call.1} parent=1 // loop_footer
      %s23 = sadd.s32 1, %s19
    $region7: #{tpu_custom_call.1} parent=1 // loop_footer_branch
      %18 = sbr.rel target = $region3
    $region8: #{tpu_custom_call.1} parent=1 // loop_exit
      _
    %670 = vsyncpa [#allocation4], 1
    %s671 = scalar_lea.sflag [#allocation4], 1
    %672 = vsyncpa %s671, 1
    %673 = vsyncpa [#allocation7], 1
    %s674 = scalar_lea.sflag [#allocation7], 1
    %675 = vsyncpa %s674, 1
    %676 = vsyncpa [#allocation10], 1
    %s677 = scalar_lea.sflag [#allocation10], 1
    %678 = vsyncpa %s677, 1
    %679 = vsyncpa [#allocation5], 1
    %s680 = scalar_lea.sflag [#allocation5], 1
    %681 = vsyncpa %s680, 1

</llo_original>
